<compile_context>
chip_gen: v7x
topology: tpu7x:2x2x1
jax: 0.10.0
libtpu: 0.0.40
codegen_flags: <defaults>
</compile_context>

<pallas_src>
import jax
import jax.numpy as jnp
from jax.experimental import pallas as pl
from jax.experimental.pallas import tpu as pltpu

_LANE = 128


def _round_up(n: int, m: int) -> int:
    return ((n + m - 1) // m) * m


def make_fake_ansatz_batched(
    constant_displacement_x: float,
    constant_displacement_y: float,
    *,
    tile_n: int = 1024,
):
    """Returns fn: (2, N) f32 coordinates -> (2, N) f32 outputs.

    Row 0 holds x coordinates, row 1 holds y coordinates (lane-dense layout).
    out[0, :] = cx * x^2 * y ; out[1, :] = cy * x * y^2.
    """
    cx = float(constant_displacement_x)
    cy = float(constant_displacement_y)

    def _kernel(x_ref, o_ref):
        # x_ref / o_ref: (2, TILE) f32 in VMEM.
        x = x_ref[0:1, :]          # (1, TILE)  static slice -> view, no copy
        y = x_ref[1:2, :]          # (1, TILE)
        xy = x * y                 # shared subexpression: 1 vmul
        o_ref[0:1, :] = (cx * xy) * x   # cx * x^2 * y
        o_ref[1:2, :] = (cy * xy) * y   # cy * x * y^2

    def batched(xy_points: jax.Array) -> jax.Array:
        xy_points = xy_points.astype(jnp.float32)
        assert xy_points.ndim == 2 and xy_points.shape[0] == 2, xy_points.shape
        n = xy_points.shape[1]

        # Tile along N: multiple of 128 lanes, as large as the data allows
        # (large tiles amortize the ~0.35 us per-grid-step overhead).
        tile = min(_round_up(tile_n, _LANE), _round_up(n, _LANE))
        n_padded = _round_up(n, tile)
        if n_padded != n:
            xy_points = jnp.pad(xy_points, ((0, 0), (0, n_padded - n)))

        grid = (n_padded // tile,)
        out = pl.pallas_call(
            _kernel,
            out_shape=jax.ShapeDtypeStruct((2, n_padded), jnp.float32),
            grid=grid,
            in_specs=[pl.BlockSpec((2, tile), lambda i: (0, i))],
            out_specs=pl.BlockSpec((2, tile), lambda i: (0, i)),
            compiler_params=pltpu.CompilerParams(
                dimension_semantics=("parallel",),
            ),
        )(xy_points)
        return out[:, :n]

    return batched


def make_fake_ansatz(
    constant_displacement_x: float, constant_displacement_y: float
):
    """Mirror of FakeAnsatz.__init__: forward takes a single (2,) coordinate."""
    batched = make_fake_ansatz_batched(
        constant_displacement_x, constant_displacement_y
    )

    def forward(x_coordinates: jax.Array) -> jax.Array:
        # Single coordinate pair: reshape to lane-dense (2, 1), run through the
        # batched Pallas kernel (padded internally to one 128-lane tile).
        pts = jnp.reshape(x_coordinates.astype(jnp.float32), (2, 1))
        return batched(pts)[:, 0]

    return forward


if __name__ == "__main__":
    key = jax.random.PRNGKey(0)

    constant_displacement_x = 2.0
    constant_displacement_y = 3.0

    # --- single-pair path (original module semantics) ---
    x_coordinates = jax.random.uniform(key, (2,), dtype=jnp.float32)
    ansatz = make_fake_ansatz(constant_displacement_x, constant_displacement_y)
    out = jax.block_until_ready(ansatz(x_coordinates))

    px, py = x_coordinates[0], x_coordinates[1]
    ref = jnp.array(
        [constant_displacement_x, constant_displacement_y], jnp.float32
    ) * jnp.array([px * px * py, px * py * py], jnp.float32)
    assert out.shape == (2,) and out.dtype == jnp.float32
    assert jnp.allclose(out, ref, atol=1e-6, rtol=1e-6)

    # --- batched path (many coordinate pairs per pallas_call) ---
    n_points = 256
    pts = jax.random.uniform(jax.random.PRNGKey(0), (2, n_points), dtype=jnp.float32)
    batched = make_fake_ansatz_batched(
        constant_displacement_x, constant_displacement_y
    )
    out_b = jax.block_until_ready(batched(pts))

    xb, yb = pts[0], pts[1]
    ref_b = jnp.stack(
        [
            constant_displacement_x * xb * xb * yb,
            constant_displacement_y * xb * yb * yb,
        ]
    )
    assert out_b.shape == (2, n_points) and out_b.dtype == jnp.float32
    assert jnp.allclose(out_b, ref_b, atol=1e-5, rtol=1e-5)

    print("KERNEL_OK")
</pallas_src>

<mosaic_0001>
module attributes {stable_mosaic.version = 11 : i64} {
  func.func @_kernel(%arg0: i32, %arg1: memref<2x128xf32, #tpu.memory_space<vmem>>, %arg2: memref<2x128xf32, #tpu.memory_space<vmem>>) attributes {dimension_semantics = [#tpu.dimension_semantics<parallel>], iteration_bounds = array<i64: 1>, scalar_prefetch = 0 : i64, scratch_operands = 0 : i64, tpu.core_type = #tpu.core_type<tc>, window_params = [{transform_indices = @transform_0, window_bounds = array<i64: 2, 128>}, {transform_indices = @transform_1, window_bounds = array<i64: 2, 128>}]} {
    %c0 = arith.constant 0 : index
    %c0_0 = arith.constant 0 : index
    %0 = vector.load %arg1[%c0, %c0_0] : memref<2x128xf32, #tpu.memory_space<vmem>>, vector<1x128xf32>
    %c1 = arith.constant 1 : index
    %c0_1 = arith.constant 0 : index
    %1 = vector.load %arg1[%c1, %c0_1] : memref<2x128xf32, #tpu.memory_space<vmem>>, vector<1x128xf32>
    %2 = arith.mulf %0, %1 : vector<1x128xf32>
    %cst = arith.constant 2.000000e+00 : f32
    %3 = vector.broadcast %cst : f32 to vector<1x128xf32>
    %4 = arith.mulf %3, %2 : vector<1x128xf32>
    %5 = arith.mulf %4, %0 : vector<1x128xf32>
    %c0_2 = arith.constant 0 : index
    %c0_3 = arith.constant 0 : index
    %6 = vector.load %arg2[%c0_2, %c0_3] : memref<2x128xf32, #tpu.memory_space<vmem>>, vector<1x128xf32>
    tpu.vector_store %arg2[%c0_2, %c0_3], %5 {strides = array<i32>} : memref<2x128xf32, #tpu.memory_space<vmem>>, vector<1x128xf32>,
    %cst_4 = arith.constant 3.000000e+00 : f32
    %7 = vector.broadcast %cst_4 : f32 to vector<1x128xf32>
    %8 = arith.mulf %7, %2 : vector<1x128xf32>
    %9 = arith.mulf %8, %1 : vector<1x128xf32>
    %c1_5 = arith.constant 1 : index
    %c0_6 = arith.constant 0 : index
    %10 = vector.load %arg2[%c1_5, %c0_6] : memref<2x128xf32, #tpu.memory_space<vmem>>, vector<1x128xf32>
    tpu.vector_store %arg2[%c1_5, %c0_6], %9 {strides = array<i32>} : memref<2x128xf32, #tpu.memory_space<vmem>>, vector<1x128xf32>,
    return
  }
  func.func @transform_0(%arg0: i32) -> (i32, i32) {
    %c0_i32 = arith.constant 0 : i32
    %c0_i32_0 = arith.constant 0 : i32
    return %c0_i32, %arg0 : i32, i32
  }
  func.func @transform_1(%arg0: i32) -> (i32, i32) {
    %c0_i32 = arith.constant 0 : i32
    %c0_i32_0 = arith.constant 0 : i32
    return %c0_i32, %arg0 : i32, i32
  }
}

</mosaic_0001>

<llo_original>
// kernel: tpu_custom_call.1
$region0: #{tpu_custom_call.1}
  #allocation0 [shape = 'u32[]', space=smem, size = 0x4, offset = 0x4, fixed_abs, tag = 'smem constant byte address 0x4 - core index']
  #allocation1 [shape = 'u32[144,128]{1,0:T(1,128)}', space=vmem, size = 0x12000, scoped, tag = 'internal scratch']
  %s0 = inlined_call_operand.hbm [shape: f32[2,128], index: 0, kind: input, shape index: {}]
  %s1 = inlined_call_operand.hbm [shape: f32[2,128], index: 1, kind: output, shape index: {}]
  %s2 = sld [smem:[#allocation0]]
  $region18: #{tpu_custom_call.1} parent=0
    _
  %s4 = ssub.s32 1, %s2
  %s5 = scalar_select 0, %s4, %s2
  $region1: #{tpu_custom_call.1} parent=0
    #allocation2 [shape = 'u8[1024]{0}', space=vmem, size = 0x400, scoped, tag = 'input window, operand 0, single buffered']
    #allocation3 [shape = 's32[1]{0}', space=sflag, size = 0x4, scoped, tag = 'scoped memory for tpu_custom_call.1']
    #allocation4 [shape = 's32[1]{0}', space=sflag, size = 0x4, scoped, tag = 'scoped memory for tpu_custom_call.1']
    #allocation5 [shape = 'u8[1024]{0}', space=vmem, size = 0x400, scoped, tag = 'output window, operand 0, single buffered']
    %6 = vsyncpa [#allocation3], 0
    %7 = vsyncpa [#allocation4], 0
    // Predicated region
    $region2: #{tpu_custom_call.1} parent=1 // pred_check
      _
    $region3: #{tpu_custom_call.1} parent=1 // pred_check_branch
      %9 = sbr.rel (0) target = $region5
    $region4: #{tpu_custom_call.1} parent=1 // pred_region
      %s11 = ssub.s32 32, 32
      %12 = vsyncadd [#allocation3], %s11
      %s14 = sshll.u32 [#allocation2], 4
      %s15 = int_to_ptr.vmem [resolvable:$true] %s14
      %17 = dma.hbm_to_vmem [thread:$0]  %s0, 32, %s15, [#allocation3]
    $region5: #{tpu_custom_call.1} parent=1 // pred_fallthru
      _
    // Predicated region
    $region6: #{tpu_custom_call.1} parent=1 // pred_check
      _
    $region7: #{tpu_custom_call.1} parent=1 // pred_check_branch
      %19 = sbr.rel (0) target = $region9
    $region8: #{tpu_custom_call.1} parent=1 // pred_region
      %20 = dma.done [#allocation3], 32
    $region9: #{tpu_custom_call.1} parent=1 // pred_fallthru
      _
    %v21 = vld [vmem:[#allocation2] sm:$0x1]
    %v22 = vld [vmem:[#allocation2 + $0x1] sm:$0x1]
    %v23 = vmul.f32 %v21, %v22
    %v24 = vmul.f32 %v23, 2.0
    %v25 = vmul.f32 %v24, %v21
    %26 = vst [vmem:[#allocation5] sm:$0x1] %v25
    %v27 = vmul.f32 %v23, 3.0
    %v28 = vmul.f32 %v27, %v22
    %29 = vst [vmem:[#allocation5 + $0x1] sm:$0x1] %v28
    // Predicated region
    $region10: #{tpu_custom_call.1} parent=1 // pred_check
      _
    $region11: #{tpu_custom_call.1} parent=1 // pred_check_branch
      %31 = sbr.rel (0) target = $region13
    $region12: #{tpu_custom_call.1} parent=1 // pred_region
      %s33 = ssub.s32 32, 32
      %34 = vsyncadd [#allocation4], %s33
      %s36 = sshll.u32 [#allocation5], 4
      %s37 = int_to_ptr.vmem [resolvable:$true] %s36
      %39 = dma.vmem_to_hbm [thread:$0]  %s37, 32, %s1, [#allocation4]
    $region13: #{tpu_custom_call.1} parent=1 // pred_fallthru
      _
    // Predicated region
    $region14: #{tpu_custom_call.1} parent=1 // pred_check
      _
    $region15: #{tpu_custom_call.1} parent=1 // pred_check_branch
      %41 = sbr.rel (0) target = $region17
    $region16: #{tpu_custom_call.1} parent=1 // pred_region
      %42 = dma.done [#allocation4], 32
    $region17: #{tpu_custom_call.1} parent=1 // pred_fallthru
      _
    %43 = vsyncpa [#allocation3], 1
    %44 = vsyncpa [#allocation4], 1

</llo_original>
